<compile_context>
chip_gen: v5e
topology: v5e:2x2
jax: 0.10.0
libtpu: 0.0.40
codegen_flags: <defaults>
</compile_context>

<pallas_src>
import jax
import jax.numpy as jnp
from jax.experimental import pallas as pl
from jax.experimental.pallas import tpu as pltpu

_X_SIZE = 24    # 2 * 3 * 4
_Y_SIZE = 90    # 3 * 5 * 6
_LANES = 128    # one full vreg row


def _fused_kernel(in_ref, o_ref):
    # in_ref / o_ref: (1, 128) f32, whole-array VMEM blocks (one vreg row).
    # Layout: lanes [0, 90) = y flat, [90, 114) = x flat, [114, 128) = zeros.
    data = in_ref[...]
    y = data[:, :_Y_SIZE]
    x = data[:, _Y_SIZE:_Y_SIZE + _X_SIZE]

    # mean(cat((x, x), dim=1)) == mean(x); fold into sum * (1/24) constant.
    b = jnp.sum(x) * (1.0 / float(_X_SIZE)) + jnp.max(y)

    # TODO(synk): the PyTorch data-dependent branch `x if mean(z) == -1 else
    # relu(y)` would change the output shape at runtime; static Pallas output
    # shapes cannot express that, so the (measure-one) relu(y) path is used.
    # Full unmasked 128-lane store; lanes >= 90 are sliced away in the wrapper.
    o_ref[...] = jnp.maximum(data, 0.0) * b


@jax.jit
def model_forward(x, y):
    # x: (2, 3, 4) f32, y: (3, 5, 6) f32  ->  out: (3, 5, 6) f32
    packed = jnp.concatenate(
        [
            y.reshape(1, _Y_SIZE),
            x.reshape(1, _X_SIZE),
            jnp.zeros((1, _LANES - _Y_SIZE - _X_SIZE), dtype=jnp.float32),
        ],
        axis=1,
    )  # (1, 128): single lane-dense row -> one input DMA

    out_row = pl.pallas_call(
        _fused_kernel,
        out_shape=jax.ShapeDtypeStruct((1, _LANES), jnp.float32),
        in_specs=[pl.BlockSpec(memory_space=pltpu.MemorySpace.VMEM)],
        out_specs=pl.BlockSpec(memory_space=pltpu.MemorySpace.VMEM),
        input_output_aliases={0: 0},  # reuse the packed temporary as output
        cost_estimate=pl.CostEstimate(
            flops=300, transcendentals=0, bytes_accessed=2 * _LANES * 4),
    )(packed)

    return out_row[:, :_Y_SIZE].reshape(y.shape)


def _reference(x, y):
    z = jnp.concatenate((x, x), axis=1)
    b = jnp.mean(z) + jnp.max(y)
    return b * jnp.maximum(y, 0.0)


if __name__ == "__main__":
    key = jax.random.PRNGKey(0)
    kx, ky = jax.random.split(key)
    x = jax.random.normal(kx, (2, 3, 4), dtype=jnp.float32)
    y = jax.random.normal(ky, (3, 5, 6), dtype=jnp.float32)

    out = model_forward(x, y)
    jax.block_until_ready(out)

    ref = _reference(x, y)
    assert out.shape == (3, 5, 6)
    assert jnp.allclose(out, ref, atol=1e-5, rtol=1e-5), "mismatch vs reference"

    print("KERNEL_OK")
</pallas_src>

<mosaic_0001>
module attributes {stable_mosaic.version = 11 : i64} {
  func.func @_fused_kernel(%arg0: memref<1x128xf32, #tpu.memory_space<vmem>>, %arg1: memref<1x128xf32, #tpu.memory_space<vmem>>) attributes {dimension_semantics = [], scalar_prefetch = 0 : i64, scratch_operands = 0 : i64, tpu.core_type = #tpu.core_type<tc>} {
    %c0 = arith.constant 0 : index
    %c0_0 = arith.constant 0 : index
    %0 = vector.load %arg0[%c0, %c0_0] : memref<1x128xf32, #tpu.memory_space<vmem>>, vector<1x128xf32>
    %1 = vector.extract_strided_slice %0 {offsets = [0, 0], sizes = [1, 90], strides = [1, 1]} : vector<1x128xf32> to vector<1x90xf32>
    %2 = vector.extract_strided_slice %0 {offsets = [0, 90], sizes = [1, 24], strides = [1, 1]} : vector<1x128xf32> to vector<1x24xf32>
    %3 = vector.shape_cast %2 : vector<1x24xf32> to vector<1x1x24xf32>
    %cst = arith.constant dense<0.000000e+00> : vector<1xf32>
    %4 = vector.multi_reduction <add>, %3, %cst [1, 2] : vector<1x1x24xf32> to vector<1xf32>
    %5 = vector.shape_cast %4 : vector<1xf32> to vector<1x1x1xf32>
    %6 = vector.extract %5[0, 0, 0] : f32 from vector<1x1x1xf32>
    %cst_1 = arith.constant 0.0416666679 : f32
    %7 = arith.mulf %6, %cst_1 : f32
    %8 = vector.shape_cast %1 : vector<1x90xf32> to vector<1x1x90xf32>
    %cst_2 = arith.constant dense<0xFF800000> : vector<1xf32>
    %9 = vector.multi_reduction <maximumf>, %8, %cst_2 [1, 2] : vector<1x1x90xf32> to vector<1xf32>
    %10 = vector.shape_cast %9 : vector<1xf32> to vector<1x1x1xf32>
    %11 = vector.extract %10[0, 0, 0] : f32 from vector<1x1x1xf32>
    %12 = arith.addf %7, %11 : f32
    %cst_3 = arith.constant 0.000000e+00 : f32
    %13 = vector.broadcast %cst_3 : f32 to vector<1x128xf32>
    %14 = arith.maximumf %0, %13 : vector<1x128xf32>
    %15 = vector.broadcast %12 : f32 to vector<1x128xf32>
    %16 = arith.mulf %14, %15 : vector<1x128xf32>
    %c0_4 = arith.constant 0 : index
    %c0_5 = arith.constant 0 : index
    %17 = vector.load %arg1[%c0_4, %c0_5] : memref<1x128xf32, #tpu.memory_space<vmem>>, vector<1x128xf32>
    tpu.vector_store %arg1[%c0_4, %c0_5], %16 {strides = array<i32>} : memref<1x128xf32, #tpu.memory_space<vmem>>, vector<1x128xf32>,
    return
  }
}

</mosaic_0001>

<llo_original>
// kernel: model_forward.1
$region0: #{model_forward.1}
  #allocation0 [shape = 'u32[]', space=smem, size = 0x4, offset = 0x4, fixed_abs, tag = 'smem constant byte address 0x4 - core index']
  #allocation1 [shape = 'u32[72,128]{1,0:T(1,128)}', space=vmem, size = 0x9000, scoped, tag = 'internal scratch']
  %s0 = inlined_call_operand.vmem [shape: f32[1,128], index: 0, kind: input, shape index: {}, may-alias: {0,1}]
  %s1 = inlined_call_operand.vmem [shape: f32[1,128], index: 1, kind: output, shape index: {}, may-alias: {0,1}]
  %s2 = sld [smem:[#allocation0]]
  $region14: #{model_forward.1} parent=0
    _
  %s4 = ssub.s32 1, %s2
  %s5 = scalar_select 0, %s4, %s2
  // Predicated region
  $region2: #{model_forward.1} parent=0 // pred_check
    _
  $region3: #{model_forward.1} parent=0 // pred_check_branch
    %7 = sbr.rel (0) target = $region5
  $region4: #{model_forward.1} parent=0 // pred_region
    _
  $region5: #{model_forward.1} parent=0 // pred_fallthru
    _
  %v8 = vld [vmem:[%s0] sm:$0x1]
  %v10 = vperm.slane %v8, 0
  %11 = vrot.lane.b32.xlu0 %v10, 38
  %v12 = vpop.permute.xlu0 %11
  %vm14 = vcmask 188416
  %v15 = vsel %vm14, %v12, 0.0
  %16 = vadd.xlane.f32.xlu0 %v15
  %v17 = vpop.xlane.xlu0 %16
  %v18 = vrot.slane %v17, 4
  %v19 = vadd.f32 %v17, %v18
  %v20 = vrot.slane %v19, 2
  %v21 = vadd.f32 %v19, %v20
  %v22 = vrot.slane %v21, 1
  %v23 = vadd.f32 %v21, %v22
  %s24 = vtos %v23
  %s25 = smul.f32 %s24, 0.041666668
  %vm26 = vcmask 729088
  %v27 = vsel %vm26, %v8, -inf
  %28 = vmax.xlane.f32.xlu0 %v27
  %v29 = vpop.xlane.xlu0 %28
  %v30 = vrot.slane %v29, 4
  %v31 = vmax.f32 %v29, %v30
  %v32 = vrot.slane %v31, 2
  %v33 = vmax.f32 %v31, %v32
  %v34 = vrot.slane %v33, 1
  %v35 = vmax.f32 %v33, %v34
  %s36 = vtos %v35
  %s37 = sadd.f32 %s25, %s36
  %v38 = vmax.f32 %v8, 0.0
  %v39 = vstv %s37
  %v40 = vmul.f32 %v38, %v39
  %41 = vst [vmem:[%s1] sm:$0x1] %v40
  // Predicated region
  $region6: #{model_forward.1} parent=0 // pred_check
    _
  $region7: #{model_forward.1} parent=0 // pred_check_branch
    %43 = sbr.rel (0) target = $region9
  $region8: #{model_forward.1} parent=0 // pred_region
    _
  $region9: #{model_forward.1} parent=0 // pred_fallthru
    _
  // Predicated region
  $region10: #{model_forward.1} parent=0 // pred_check
    _
  $region11: #{model_forward.1} parent=0 // pred_check_branch
    %45 = sbr.rel (0) target = $region13
  $region12: #{model_forward.1} parent=0 // pred_region
    _
  $region13: #{model_forward.1} parent=0 // pred_fallthru
    _

</llo_original>
